<compile_context>
chip_gen: v7x
topology: tpu7x:2x2x1
jax: 0.10.0
libtpu: 0.0.40
codegen_flags: <defaults>
</compile_context>

<pallas_src>
import functools

import jax
import jax.numpy as jnp
from jax.experimental import pallas as pl
from jax.experimental.pallas import tpu as pltpu


# ------------------------------- kernels ----------------------------------- #

def _projector_kernel_prenorm(x_ref, pos_ref, gamma_ref, beta_ref, o_ref, *, eps):
    """LayerNorm (two-pass stats, f32) + cast-to-pos-dtype + positional add."""
    x = x_ref[...].astype(jnp.float32)                       # (TL, D)
    inv_d = 1.0 / x.shape[-1]
    mean = jnp.sum(x, axis=-1, keepdims=True) * inv_d        # (TL, 1)
    xc = x - mean
    var = jnp.sum(xc * xc, axis=-1, keepdims=True) * inv_d   # two-pass variance
    y = xc * jax.lax.rsqrt(var + eps)

    gamma = gamma_ref[...]
    beta = beta_ref[...]
    if gamma.dtype != jnp.float32:
        gamma = gamma.astype(jnp.float32)
    if beta.dtype != jnp.float32:
        beta = beta.astype(jnp.float32)
    y = y * gamma + beta

    # Match PyTorch: LN result lives in x's dtype, then `.to(pos_emb.dtype)`.
    # Collapse redundant casts (static dtype checks -> no extra VALU work).
    if x_ref.dtype == o_ref.dtype:
        y = y.astype(o_ref.dtype)
    else:
        if x_ref.dtype != jnp.float32:
            y = y.astype(x_ref.dtype)
        y = y.astype(o_ref.dtype)

    o_ref[...] = y + pos_ref[...]


def _projector_kernel_add(x_ref, pos_ref, o_ref):
    """No prenorm: cast-to-pos-dtype + positional add only."""
    o_ref[...] = x_ref[...].astype(o_ref.dtype) + pos_ref[...]


# ------------------------------- wrapper ------------------------------------ #

def _pick_tile_rows(L, bytes_per_row, target_bytes=2 << 20):
    """Pick a multiple-of-8 token tile that (nearly) divides L, ~target_bytes big."""
    if L <= 8:
        return L
    n_tiles = max(1, -(-(L * bytes_per_row) // target_bytes))   # ceil
    if n_tiles == 1:
        return L
    tl = -(-L // n_tiles)                                       # ceil(L / n_tiles)
    tl = max(8, ((tl + 7) // 8) * 8)                            # round up to mult of 8
    if tl >= L:
        return L
    # Prefer a nearby multiple-of-8 tile that divides L (no ragged last tile).
    for cand in range(tl, max(7, tl - 64), -8):
        if L % cand == 0:
            return cand
    return tl


def projector_forward(x, pos_emb, ln_gamma=None, ln_beta=None, eos_tokens=None, *,
                      prenorm, eps=1e-5, tile_rows=None):
    """JAX wrapper matching Projector.forward.

    x:          (B, L, D) features from the visual backbone
    pos_emb:    (1, L, D) positional-embedding parameter
    ln_gamma:   (1, D) LayerNorm weight (used iff prenorm)
    ln_beta:    (1, D) LayerNorm bias   (used iff prenorm)
    eos_tokens: (1, num_eos, out_D) or None
    eps:        torch.nn.LayerNorm default is 1e-5 (build_prenorm uses the default)
    """
    B, L, D = x.shape
    out_dtype = pos_emb.dtype
    x_item = jnp.dtype(x.dtype).itemsize
    out_item = jnp.dtype(out_dtype).itemsize
    bytes_per_row = D * (x_item + 2 * out_item)          # x + pos + out streams

    # Tile-row selection (multiple of 8, near-divisor of L, ~2 MiB per tile).
    if tile_rows is None:
        tl = _pick_tile_rows(L, bytes_per_row)
    else:
        tl = min(L, max(8, (int(tile_rows) // 8) * 8))
    if tl >= L:
        tl = L
    num_lt = pl.cdiv(L, tl)

    # Explicit VMEM budget: 2-deep pipeline of the three streams + params + slack,
    # kept well under the v7x (64 MiB physical) scoped limit.
    param_bytes = 2 * D * jnp.dtype(ln_gamma.dtype).itemsize if prenorm else 0
    dbl_buf = 2 * tl * bytes_per_row + param_bytes
    vmem_limit = int(min(max(2 * dbl_buf + (2 << 20), 16 << 20), 48 << 20))

    # Advisory cost estimate for the XLA scheduler (mem-bound kernel).
    bytes_accessed = B * L * D * (x_item + out_item) + L * D * out_item + param_bytes
    cost = pl.CostEstimate(
        flops=(8 if prenorm else 1) * B * L * D,
        transcendentals=(B * L) if prenorm else 0,
        bytes_accessed=bytes_accessed,
    )

    x_spec = pl.BlockSpec((None, tl, D), lambda lt, b: (b, lt, 0))
    pos_spec = pl.BlockSpec((None, tl, D), lambda lt, b: (0, lt, 0))
    out_spec = pl.BlockSpec((None, tl, D), lambda lt, b: (b, lt, 0))

    if prenorm:
        kernel = functools.partial(_projector_kernel_prenorm, eps=eps)
        in_specs = [x_spec, pos_spec,
                    pl.BlockSpec((1, D), lambda lt, b: (0, 0)),
                    pl.BlockSpec((1, D), lambda lt, b: (0, 0))]
        args = (x, pos_emb, ln_gamma, ln_beta)
    else:
        kernel = _projector_kernel_add
        in_specs = [x_spec, pos_spec]
        args = (x, pos_emb)

    pos_x = pl.pallas_call(
        kernel,
        out_shape=jax.ShapeDtypeStruct((B, L, D), out_dtype),
        grid=(num_lt, B),
        in_specs=in_specs,
        out_specs=out_spec,
        compiler_params=pltpu.CompilerParams(
            dimension_semantics=("parallel", "parallel"),
            vmem_limit_bytes=vmem_limit),
        cost_estimate=cost,
    )(*args)

    # TODO(synk): Projector._forward is abstract in the base class (subclasses
    # implement e.g. the C-Abstractor resampler); identity is used here.
    out = pos_x

    if eos_tokens is not None:
        eos = jnp.broadcast_to(eos_tokens, (B,) + eos_tokens.shape[1:]).astype(out.dtype)
        out = jnp.concatenate([out, eos], axis=1)
    return out


# ------------------------------- reference ---------------------------------- #

def _reference_forward(x, pos_emb, ln_gamma, ln_beta, eos_tokens, *, prenorm, eps=1e-5):
    """Pure-JAX reference (PyTorch op order: prenorm first, then cast, then add)."""
    if prenorm:
        xf = x.astype(jnp.float32)
        mean = jnp.mean(xf, axis=-1, keepdims=True)
        var = jnp.mean(jnp.square(xf - mean), axis=-1, keepdims=True)
        xf = (xf - mean) * jax.lax.rsqrt(var + eps) * ln_gamma + ln_beta
        x = xf.astype(x.dtype)
    x = x.astype(pos_emb.dtype)
    out = x + pos_emb
    if eos_tokens is not None:
        B = out.shape[0]
        eos = jnp.broadcast_to(eos_tokens, (B,) + eos_tokens.shape[1:]).astype(out.dtype)
        out = jnp.concatenate([out, eos], axis=1)
    return out


# --------------------------------- main -------------------------------------- #

if __name__ == "__main__":
    # Small config: encoder_hidden_size=128, num_input_tokens=16, batch=2,
    # pos_emb=True, prenorm exercised both ways, num_eos_tokens tested too.
    B, L, D = 2, 16, 128
    eps = 1e-5  # torch.nn.LayerNorm default (build_prenorm passes no eps)

    key = jax.random.PRNGKey(0)
    kx, kpos, kx2, keos = jax.random.split(key, 4)

    x = jax.random.normal(kx, (B, L, D), dtype=jnp.float32)
    # build_pos_embeds: zeros then trunc_normal_(std=0.02).
    pos_emb = 0.02 * jax.random.truncated_normal(kpos, -2.0, 2.0, (1, L, D), jnp.float32)
    # build_prenorm: nn.LayerNorm default init (weight=1, bias=0).
    ln_gamma = jnp.ones((1, D), jnp.float32)
    ln_beta = jnp.zeros((1, D), jnp.float32)
    eos_tokens = None  # num_eos_tokens == 0 default

    # 1) prenorm=True, default tiling.
    ref = _reference_forward(x, pos_emb, ln_gamma, ln_beta, eos_tokens, prenorm=True, eps=eps)
    out = projector_forward(x, pos_emb, ln_gamma, ln_beta, eos_tokens, prenorm=True, eps=eps)
    out = jax.block_until_ready(out)
    assert out.shape == (B, L, D), out.shape
    assert jnp.allclose(out, ref, atol=1e-4, rtol=1e-4), "mismatch (prenorm, default tile)"

    # 2) Force multiple L tiles (tile_rows=8 -> grid=(2, B)).
    out_t = projector_forward(x, pos_emb, ln_gamma, ln_beta, eos_tokens,
                              prenorm=True, eps=eps, tile_rows=8)
    out_t = jax.block_until_ready(out_t)
    assert jnp.allclose(out_t, ref, atol=1e-4, rtol=1e-4), "mismatch (prenorm, tiled)"

    # 3) prenorm=False path (2-stream copy+add, no gamma/beta streams).
    ref_np = _reference_forward(x, pos_emb, None, None, eos_tokens, prenorm=False, eps=eps)
    out_np = projector_forward(x, pos_emb, None, None, eos_tokens, prenorm=False, eps=eps)
    out_np = jax.block_until_ready(out_np)
    assert jnp.allclose(out_np, ref_np, atol=1e-6, rtol=1e-6), "mismatch (no prenorm)"

    # 4) Ragged last L-tile + large-mean rows (exercises two-pass variance & masked stores).
    L2 = 24
    x2 = jax.random.normal(kx2, (B, L2, D), jnp.float32) + 3.0
    pos2 = 0.02 * jax.random.truncated_normal(kpos, -2.0, 2.0, (1, L2, D), jnp.float32)
    ref2 = _reference_forward(x2, pos2, ln_gamma, ln_beta, None, prenorm=True, eps=eps)
    out2 = projector_forward(x2, pos2, ln_gamma, ln_beta, None,
                             prenorm=True, eps=eps, tile_rows=16)
    out2 = jax.block_until_ready(out2)
    assert jnp.allclose(out2, ref2, atol=1e-4, rtol=1e-4), "mismatch (ragged tile)"

    # 5) num_eos_tokens > 0 path (concat along sequence).
    eos = 0.02 * jax.random.truncated_normal(keos, -2.0, 2.0, (1, 2, D), jnp.float32)
    ref_e = _reference_forward(x, pos_emb, ln_gamma, ln_beta, eos, prenorm=True, eps=eps)
    out_e = projector_forward(x, pos_emb, ln_gamma, ln_beta, eos, prenorm=True, eps=eps)
    out_e = jax.block_until_ready(out_e)
    assert out_e.shape == (B, L + 2, D), out_e.shape
    assert jnp.allclose(out_e, ref_e, atol=1e-4, rtol=1e-4), "mismatch (eos tokens)"

    print("KERNEL_OK")
</pallas_src>

<mosaic_0001>
module attributes {stable_mosaic.version = 11 : i64} {
  func.func @_projector_kernel_prenorm(%arg0: i32, %arg1: i32, %arg2: memref<1x16x128xf32, #tpu.memory_space<vmem>>, %arg3: memref<1x16x128xf32, #tpu.memory_space<vmem>>, %arg4: memref<1x128xf32, #tpu.memory_space<vmem>>, %arg5: memref<1x128xf32, #tpu.memory_space<vmem>>, %arg6: memref<1x16x128xf32, #tpu.memory_space<vmem>>) attributes {dimension_semantics = [#tpu.dimension_semantics<parallel>, #tpu.dimension_semantics<parallel>], iteration_bounds = array<i64: 1, 2>, scalar_prefetch = 0 : i64, scratch_operands = 0 : i64, tpu.core_type = #tpu.core_type<tc>, window_params = [{transform_indices = @transform_0, window_bounds = array<i64: 1, 16, 128>}, {transform_indices = @transform_1, window_bounds = array<i64: 1, 16, 128>}, {pipeline_mode = #tpu.pipeline_mode<synchronous>, transform_indices = @transform_2, window_bounds = array<i64: 1, 128>}, {pipeline_mode = #tpu.pipeline_mode<synchronous>, transform_indices = @transform_3, window_bounds = array<i64: 1, 128>}, {transform_indices = @transform_4, window_bounds = array<i64: 1, 16, 128>}]} {
    %c0 = arith.constant 0 : index
    %c0_0 = arith.constant 0 : index
    %c0_1 = arith.constant 0 : index
    %0 = vector.load %arg2[%c0, %c0_0, %c0_1] : memref<1x16x128xf32, #tpu.memory_space<vmem>>, vector<1x16x128xf32>
    %1 = vector.shape_cast %0 : vector<1x16x128xf32> to vector<16x128xf32>
    %cst = arith.constant dense<0.000000e+00> : vector<16xf32>
    %2 = vector.multi_reduction <add>, %1, %cst [1] : vector<16x128xf32> to vector<16xf32>
    %3 = vector.shape_cast %2 : vector<16xf32> to vector<16x1xf32>
    %cst_2 = arith.constant 7.812500e-03 : f32
    %4 = vector.broadcast %cst_2 : f32 to vector<16x1xf32>
    %5 = arith.mulf %3, %4 : vector<16x1xf32>
    %6 = vector.broadcast %5 : vector<16x1xf32> to vector<16x128xf32>
    %7 = arith.subf %1, %6 : vector<16x128xf32>
    %8 = arith.mulf %7, %7 : vector<16x128xf32>
    %cst_3 = arith.constant dense<0.000000e+00> : vector<16xf32>
    %9 = vector.multi_reduction <add>, %8, %cst_3 [1] : vector<16x128xf32> to vector<16xf32>
    %10 = vector.shape_cast %9 : vector<16xf32> to vector<16x1xf32>
    %cst_4 = arith.constant 7.812500e-03 : f32
    %11 = vector.broadcast %cst_4 : f32 to vector<16x1xf32>
    %12 = arith.mulf %10, %11 : vector<16x1xf32>
    %cst_5 = arith.constant 9.99999974E-6 : f32
    %13 = vector.broadcast %cst_5 : f32 to vector<16x1xf32>
    %14 = arith.addf %12, %13 : vector<16x1xf32>
    %15 = math.rsqrt %14 : vector<16x1xf32>
    %16 = vector.broadcast %15 : vector<16x1xf32> to vector<16x128xf32>
    %17 = arith.mulf %7, %16 : vector<16x128xf32>
    %c0_6 = arith.constant 0 : index
    %c0_7 = arith.constant 0 : index
    %18 = vector.load %arg4[%c0_6, %c0_7] : memref<1x128xf32, #tpu.memory_space<vmem>>, vector<1x128xf32>
    %c0_8 = arith.constant 0 : index
    %c0_9 = arith.constant 0 : index
    %19 = vector.load %arg5[%c0_8, %c0_9] : memref<1x128xf32, #tpu.memory_space<vmem>>, vector<1x128xf32>
    %20 = vector.broadcast %18 : vector<1x128xf32> to vector<16x128xf32>
    %21 = arith.mulf %17, %20 : vector<16x128xf32>
    %22 = vector.broadcast %19 : vector<1x128xf32> to vector<16x128xf32>
    %23 = arith.addf %21, %22 : vector<16x128xf32>
    %c0_10 = arith.constant 0 : index
    %c0_11 = arith.constant 0 : index
    %c0_12 = arith.constant 0 : index
    %24 = vector.load %arg3[%c0_10, %c0_11, %c0_12] : memref<1x16x128xf32, #tpu.memory_space<vmem>>, vector<1x16x128xf32>
    %25 = vector.shape_cast %24 : vector<1x16x128xf32> to vector<16x128xf32>
    %26 = arith.addf %23, %25 : vector<16x128xf32>
    %c0_13 = arith.constant 0 : index
    %c0_14 = arith.constant 0 : index
    %c0_15 = arith.constant 0 : index
    %27 = vector.load %arg6[%c0_13, %c0_14, %c0_15] : memref<1x16x128xf32, #tpu.memory_space<vmem>>, vector<1x16x128xf32>
    %28 = vector.shape_cast %27 : vector<1x16x128xf32> to vector<16x128xf32>
    %29 = vector.shape_cast %26 : vector<16x128xf32> to vector<1x16x128xf32>
    tpu.vector_store %arg6[%c0_13, %c0_14, %c0_15], %29 {strides = array<i32>} : memref<1x16x128xf32, #tpu.memory_space<vmem>>, vector<1x16x128xf32>,
    return
  }
  func.func @transform_0(%arg0: i32, %arg1: i32) -> (i32, i32, i32) {
    %c0_i32 = arith.constant 0 : i32
    %c0_i32_0 = arith.constant 0 : i32
    return %arg1, %arg0, %c0_i32 : i32, i32, i32
  }
  func.func @transform_1(%arg0: i32, %arg1: i32) -> (i32, i32, i32) {
    %c0_i32 = arith.constant 0 : i32
    %c0_i32_0 = arith.constant 0 : i32
    %c0_i32_1 = arith.constant 0 : i32
    return %c0_i32, %arg0, %c0_i32_0 : i32, i32, i32
  }
  func.func @transform_2(%arg0: i32, %arg1: i32) -> (i32, i32) {
    %c0_i32 = arith.constant 0 : i32
    %c0_i32_0 = arith.constant 0 : i32
    %c0_i32_1 = arith.constant 0 : i32
    return %c0_i32, %c0_i32_0 : i32, i32
  }
  func.func @transform_3(%arg0: i32, %arg1: i32) -> (i32, i32) {
    %c0_i32 = arith.constant 0 : i32
    %c0_i32_0 = arith.constant 0 : i32
    %c0_i32_1 = arith.constant 0 : i32
    return %c0_i32, %c0_i32_0 : i32, i32
  }
  func.func @transform_4(%arg0: i32, %arg1: i32) -> (i32, i32, i32) {
    %c0_i32 = arith.constant 0 : i32
    %c0_i32_0 = arith.constant 0 : i32
    return %arg1, %arg0, %c0_i32 : i32, i32, i32
  }
}

</mosaic_0001>

<llo_original>
// kernel: tpu_custom_call.1
$region0: #{tpu_custom_call.1}
  #allocation0 [shape = 'u32[]', space=smem, size = 0x4, offset = 0x4, fixed_abs, tag = 'smem constant byte address 0x4 - core index']
  #allocation1 [shape = 'u32[144,128]{1,0:T(1,128)}', space=vmem, size = 0x12000, scoped, tag = 'internal scratch']
  %s0 = inlined_call_operand.hbm [shape: f32[2,16,128], index: 0, kind: input, shape index: {}]
  %s1 = inlined_call_operand.hbm [shape: f32[1,16,128], index: 1, kind: input, shape index: {}]
  %s2 = inlined_call_operand.vmem [shape: f32[1,128], index: 2, kind: input, shape index: {}]
  %s3 = inlined_call_operand.vmem [shape: f32[1,128], index: 3, kind: input, shape index: {}]
  %s4 = inlined_call_operand.hbm [shape: f32[2,16,128], index: 4, kind: output, shape index: {}]
  %s5 = sld [smem:[#allocation0]]
  $region57: #{tpu_custom_call.1} parent=0
    _
  %s7 = ssub.s32 1, %s5
  %s8 = scalar_select 0, %s7, %s5
  $region1: #{tpu_custom_call.1} parent=0
    #allocation2 [shape = 'u8[16384]{0}', space=vmem, size = 0x4000, scoped, tag = 'input window, operand 0']
    #allocation3 [shape = 's32[2]{0}', space=sflag, size = 0x8, scoped, tag = 'scoped memory for tpu_custom_call.1']
    #allocation4 [shape = 's32[2]{0}', space=sflag, size = 0x8, scoped, tag = 'scoped memory for tpu_custom_call.1']
    #allocation5 [shape = 'u8[8192]{0}', space=vmem, size = 0x2000, scoped, tag = 'input window, operand 1, single buffered']
    #allocation6 [shape = 's32[1]{0}', space=sflag, size = 0x4, scoped, tag = 'scoped memory for tpu_custom_call.1']
    #allocation7 [shape = 'u8[16384]{0}', space=vmem, size = 0x4000, scoped, tag = 'output window, operand 0']
    %9 = vsyncpa [#allocation3], 0
    %s10 = scalar_lea.sflag [#allocation3], 1
    %11 = vsyncpa %s10, 0
    %12 = vsyncpa [#allocation6], 0
    %13 = vsyncpa [#allocation4], 0
    %s14 = scalar_lea.sflag [#allocation4], 1
    %15 = vsyncpa %s14, 0
    loop: start=0, step=1, limit=4
    $region2: #{tpu_custom_call.1} parent=1 // loop_pre_header
      _
    $region3: #{tpu_custom_call.1} parent=1 // loop_header
      %s17 = sphi 0, %s21
      %p18 = scmp.ge.s32.totalorder %s17, 4
      %s24 = sphi 0, %s36
      %s25 = sphi 0, %s32
      %s26 = sphi 0, %s24
      %s27 = sphi 0, %s25
      %s28 = sphi 0, %s26
      %s29 = sphi 0, %s27
      %s41 = sphi 0, %s43
      %s44 = sphi 0, %s41
      %s45 = sphi 0, %s44
      %s61 = sphi 0, %s45
      %s67 = sphi 0, %s69
      %s70 = sphi 0, %s67
      %s71 = sphi 0, %s70
      %s87 = sphi 0, %s71
      %s91 = sphi 0, %s91
      %s93 = sphi 0, %s91
      %s94 = sphi 0, %s93
      %s108 = sphi 0, %s94
      %s112 = sphi 0, %s112
      %s114 = sphi 0, %s112
      %s115 = sphi 0, %s114
      %s129 = sphi 0, %s115
      %s137 = sphi 0, %s139
      %s140 = sphi 0, %s137
      %s141 = sphi 0, %s140
      %s157 = sphi 0, %s141
    $region4: #{tpu_custom_call.1} parent=1 // loop_header_branch
      %20 = sbr.rel (%p18) target = $region8
    $region5: #{tpu_custom_call.1} parent=1 // loop_body
      %s22 = ssub.s32 %s17, 1
      %s23 = ssub.s32 %s17, 2
      %s30 = sadd.s32 1, %s25
      %p31 = scmp.ge.s32.totalorder %s30, 2
      %s32 = scalar_select %p31, 0, %s30
      %s33 = sadd.s32 1, %s24
      %s34 = scalar_select %p31, %s33, %s24
      %p35 = scmp.ge.s32.totalorder %s34, 1
      %s36 = scalar_select %p35, 0, %s34
      %s37 = ssub.s32 %s25, %s32
      %s38 = ssub.s32 %s24, %s36
      %s39 = sor.u32 %s37, %s38
      %p40 = scmp.eq.s32.totalorder %s39, 0
      %s42 = sadd.s32 %s41, 1
      %s43 = scalar_select %p40, %s41, %s42
      %p46 = pneg %p40
      %p47 = scmp.eq.s32.totalorder %s17, 1
      %p48 = por %p46, %p47
      %p49 = scmp.ne.s32.totalorder %s41, %s44
      %p50 = scmp.eq.s32.totalorder %s17, 0
      %p51 = por %p49, %p50
      %p52 = scmp.ne.s32.totalorder %s41, %s44
      %p53 = scmp.eq.s32.totalorder %s22, 1
      %p54 = por %p52, %p53
      %p55 = scmp.ne.s32.totalorder %s44, %s45
      %p56 = scmp.eq.s32.totalorder %s22, 0
      %p57 = por %p55, %p56
      %p58 = scmp.ne.s32.totalorder %s44, %s45
      %p59 = scmp.eq.s32.totalorder %s23, 1
      %p60 = por %p58, %p59
      %p62 = scmp.ne.s32.totalorder %s45, %s61
      %p63 = scmp.eq.s32.totalorder %s23, 0
      %p64 = por %p62, %p63
      %s65 = ssub.s32 %s24, %s36
      %p66 = scmp.eq.s32.totalorder %s65, 0
      %s68 = sadd.s32 %s67, 1
      %s69 = scalar_select %p66, %s67, %s68
      %p72 = pneg %p66
      %p73 = scmp.eq.s32.totalorder %s17, 1
      %p74 = por %p72, %p73
      %p75 = scmp.ne.s32.totalorder %s67, %s70
      %p76 = scmp.eq.s32.totalorder %s17, 0
      %p77 = por %p75, %p76
      %p78 = scmp.ne.s32.totalorder %s67, %s70
      %p79 = scmp.eq.s32.totalorder %s22, 1
      %p80 = por %p78, %p79
      %p81 = scmp.ne.s32.totalorder %s70, %s71
      %p82 = scmp.eq.s32.totalorder %s22, 0
      %p83 = por %p81, %p82
      %p84 = scmp.ne.s32.totalorder %s70, %s71
      %p85 = scmp.eq.s32.totalorder %s23, 1
      %p86 = por %p84, %p85
      %p88 = scmp.ne.s32.totalorder %s71, %s87
      %p89 = scmp.eq.s32.totalorder %s23, 0
      %p90 = por %p88, %p89
      %s92 = sadd.s32 %s91, 1
      %p95 = scmp.eq.s32.totalorder %s17, 1
      %p96 = scmp.ne.s32.totalorder %s91, %s93
      %p97 = scmp.eq.s32.totalorder %s17, 0
      %p98 = por %p96, %p97
      %p99 = scmp.ne.s32.totalorder %s91, %s93
      %p100 = scmp.eq.s32.totalorder %s22, 1
      %p101 = por %p99, %p100
      %p102 = scmp.ne.s32.totalorder %s93, %s94
      %p103 = scmp.eq.s32.totalorder %s22, 0
      %p104 = por %p102, %p103
      %p105 = scmp.ne.s32.totalorder %s93, %s94
      %p106 = scmp.eq.s32.totalorder %s23, 1
      %p107 = por %p105, %p106
      %p109 = scmp.ne.s32.totalorder %s94, %s108
      %p110 = scmp.eq.s32.totalorder %s23, 0
      %p111 = por %p109, %p110
      %s113 = sadd.s32 %s112, 1
      %p116 = scmp.eq.s32.totalorder %s17, 1
      %p117 = scmp.ne.s32.totalorder %s112, %s114
      %p118 = scmp.eq.s32.totalorder %s17, 0
      %p119 = por %p117, %p118
      %p120 = scmp.ne.s32.totalorder %s112, %s114
      %p121 = scmp.eq.s32.totalorder %s22, 1
      %p122 = por %p120, %p121
      %p123 = scmp.ne.s32.totalorder %s114, %s115
      %p124 = scmp.eq.s32.totalorder %s22, 0
      %p125 = por %p123, %p124
      %p126 = scmp.ne.s32.totalorder %s114, %s115
      %p127 = scmp.eq.s32.totalorder %s23, 1
      %p128 = por %p126, %p127
      %p130 = scmp.ne.s32.totalorder %s115, %s129
      %p131 = scmp.eq.s32.totalorder %s23, 0
      %p132 = por %p130, %p131
      %s133 = ssub.s32 %s25, %s32
      %s134 = ssub.s32 %s24, %s36
      %s135 = sor.u32 %s133, %s134
      %p136 = scmp.eq.s32.totalorder %s135, 0
      %s138 = sadd.s32 %s137, 1
      %s139 = scalar_select %p136, %s137, %s138
      %p142 = pneg %p136
      %p143 = scmp.eq.s32.totalorder %s17, 1
      %p144 = por %p142, %p143
      %p145 = scmp.ne.s32.totalorder %s137, %s140
      %p146 = scmp.eq.s32.totalorder %s17, 0
      %p147 = por %p145, %p146
      %p148 = scmp.ne.s32.totalorder %s137, %s140
      %p149 = scmp.eq.s32.totalorder %s22, 1
      %p150 = por %p148, %p149
      %p151 = scmp.ne.s32.totalorder %s140, %s141
      %p152 = scmp.eq.s32.totalorder %s22, 0
      %p153 = por %p151, %p152
      %p154 = scmp.ne.s32.totalorder %s140, %s141
      %p155 = scmp.eq.s32.totalorder %s23, 1
      %p156 = por %p154, %p155
      %p158 = scmp.ne.s32.totalorder %s141, %s157
      %p159 = scmp.eq.s32.totalorder %s23, 0
      %p160 = por %p158, %p159
      %p161 = scmp.le.s32.totalorder 1, %s17
      %p162 = scmp.lt.s32.totalorder %s17, 3
      %p163 = pnand %p161, %p162
      %p164 = pneg %p163
      // Predicated region
      $region9: #{tpu_custom_call.1} parent=5 // pred_check
        _
      $region10: #{tpu_custom_call.1} parent=5 // pred_check_branch
        %166 = sbr.rel (%p163) target = $region12
      $region11: #{tpu_custom_call.1} parent=5 // pred_region
        %s167 = ssub.s32 %s17, 1
        // Predicated region
        $region13: #{tpu_custom_call.1} parent=11 // pred_check
          %p168 = pneg %p83
        $region14: #{tpu_custom_call.1} parent=11 // pred_check_branch
          %170 = sbr.rel (%p168) target = $region16
        $region15: #{tpu_custom_call.1} parent=11 // pred_region
          %s171 = smul.u32 2, %s26
          %s173 = ssub.s32 256, 256
          %174 = vsyncadd [#allocation6], %s173
          %s175 = smul.addr %s171, 128
          %s176 = scalar_lea.hbm %s1, %s175
          %s177 = sshll.u32 [#allocation5], 4
          %s178 = int_to_ptr.vmem [resolvable:$true] %s177
          %183 = dma.hbm_to_vmem [thread:$0]  %s176, 256, %s178, [#allocation6], 128, 128, 8
        $region16: #{tpu_custom_call.1} parent=11 // pred_fallthru
          _
        // Predicated region
        $region17: #{tpu_custom_call.1} parent=11 // pred_check
          %p184 = pneg %p104
        $region18: #{tpu_custom_call.1} parent=11 // pred_check_branch
          %186 = sbr.rel (%p184) target = $region20
        $region19: #{tpu_custom_call.1} parent=11 // pred_region
          _
        $region20: #{tpu_custom_call.1} parent=11 // pred_fallthru
          _
        // Predicated region
        $region21: #{tpu_custom_call.1} parent=11 // pred_check
          %p187 = pneg %p125
        $region22: #{tpu_custom_call.1} parent=11 // pred_check_branch
          %189 = sbr.rel (%p187) target = $region24
        $region23: #{tpu_custom_call.1} parent=11 // pred_region
          _
        $region24: #{tpu_custom_call.1} parent=11 // pred_fallthru
          _
      $region12: #{tpu_custom_call.1} parent=5 // pred_fallthru
        _
      %p190 = scmp.lt.s32.totalorder %s17, 2
      // Predicated region
      $region25: #{tpu_custom_call.1} parent=5 // pred_check
        %p191 = pneg %p190
      $region26: #{tpu_custom_call.1} parent=5 // pred_check_branch
        %193 = sbr.rel (%p191) target = $region28
      $region27: #{tpu_custom_call.1} parent=5 // pred_region
        // Predicated region
        $region29: #{tpu_custom_call.1} parent=27 // pred_check
          %p194 = pneg %p51
        $region30: #{tpu_custom_call.1} parent=27 // pred_check_branch
          %196 = sbr.rel (%p194) target = $region32
        $region31: #{tpu_custom_call.1} parent=27 // pred_region
          %s197 = sand.u32 %s41, 1
          %s198 = scalar_lea.sflag [#allocation3], %s197
          %s199 = sand.u32 %s41, 1
          %s200 = smul.addr %s199, 16
          %s201 = scalar_lea.vmem [#allocation2], %s200
          %s202 = smul.u32 2, %s24
          %s204 = ssub.s32 256, 256
          %205 = vsyncadd %s198, %s204
          %s206 = smul.addr %s25, 2
          %s207 = sadd.s32 %s202, %s206
          %s208 = smul.addr %s207, 128
          %s209 = scalar_lea.hbm %s0, %s208
          %s210 = sshll.u32 %s201, 4
          %s211 = int_to_ptr.vmem [resolvable:$true] %s210
          %216 = dma.hbm_to_vmem [thread:$0]  %s209, 256, %s211, %s198, 128, 128, 8
        $region32: #{tpu_custom_call.1} parent=27 // pred_fallthru
          _
      $region28: #{tpu_custom_call.1} parent=5 // pred_fallthru
        _
      %p217 = scmp.le.s32.totalorder 1, %s17
      %p218 = scmp.lt.s32.totalorder %s17, 3
      %p219 = pnand %p217, %p218
      %p220 = pneg %p219
      // Predicated region
      $region33: #{tpu_custom_call.1} parent=5 // pred_check
        _
      $region34: #{tpu_custom_call.1} parent=5 // pred_check_branch
        %222 = sbr.rel (%p219) target = $region36
      $region35: #{tpu_custom_call.1} parent=5 // pred_region
        %s223 = ssub.s32 %s17, 1
        %s224 = sand.u32 %s44, 1
        %s225 = scalar_lea.sflag [#allocation3], %s224
        %s226 = sand.u32 %s44, 1
        %s227 = smul.addr %s226, 16
        %s228 = scalar_lea.vmem [#allocation2], %s227
        // Predicated region
        $region37: #{tpu_custom_call.1} parent=35 // pred_check
          %p229 = pneg %p57
        $region38: #{tpu_custom_call.1} parent=35 // pred_check_branch
          %231 = sbr.rel (%p229) target = $region40
        $region39: #{tpu_custom_call.1} parent=35 // pred_region
          %232 = dma.done %s225, 256
        $region40: #{tpu_custom_call.1} parent=35 // pred_fallthru
          _
        // Predicated region
        $region41: #{tpu_custom_call.1} parent=35 // pred_check
          %p233 = pneg %p83
        $region42: #{tpu_custom_call.1} parent=35 // pred_check_branch
          %235 = sbr.rel (%p233) target = $region44
        $region43: #{tpu_custom_call.1} parent=35 // pred_region
          %236 = dma.done [#allocation6], 256
        $region44: #{tpu_custom_call.1} parent=35 // pred_fallthru
          _
        %s237 = sand.u32 %s44, 1
        %s238 = scalar_lea.sflag [#allocation3], %s237
        %s239 = sand.u32 %s44, 1
        %s240 = smul.addr %s239, 16
        %s241 = scalar_lea.vmem [#allocation2], %s240
        %p242 = pneg %p57
        %p243 = pneg %p54
        %p244 = pneg %p83
        %p245 = pneg %p80
        %p246 = pneg %p104
        %p247 = pneg %p101
        %p248 = pneg %p125
        %p249 = pneg %p122
        %p250 = pneg %p153
        %p251 = pneg %p150
        %s252 = sand.u32 %s140, 1
        %s253 = scalar_lea.sflag [#allocation4], %s252
        %s254 = sand.u32 %s140, 1
        %s255 = smul.addr %s254, 16
        %s256 = scalar_lea.vmem [#allocation7], %s255
        %s257 = smul.u32 2, %s26
        %s258 = smul.u32 2, %s26
        %s259 = smul.u32 2, %s26
        %v260 = vld [vmem:[%s228] sm:$0xff]
        %v261 = vld [vmem:[%s228 + $0x8] sm:$0xff]
        %262 = vadd.xlane.f32.xlu0 %v260
        %v263 = vpop.xlane.xlu0 %262
        %264 = vadd.xlane.f32.xlu0 %v261
        %v265 = vpop.xlane.xlu0 %264
        %v266 = vmul.f32 %v263, 0.0078125
        %v267 = vmul.f32 %v265, 0.0078125
        %v268 = vsub.f32 %v260, %v266
        %v269 = vsub.f32 %v261, %v267
        %v270 = vmul.f32 %v268, %v268
        %v271 = vmul.f32 %v269, %v269
        %272 = vadd.xlane.f32.xlu0 %v270
        %v273 = vpop.xlane.xlu0 %272
        %274 = vadd.xlane.f32.xlu0 %v271
        %v275 = vpop.xlane.xlu0 %274
        %v276 = vmul.f32 %v273, 0.0078125
        %v277 = vmul.f32 %v275, 0.0078125
        %v278 = vadd.f32 %v276, 1e-05
        %v279 = vadd.f32 %v277, 1e-05
        %v280 = vrsqrt.pop %v278
        %v281 = vrsqrt.pop %v279
        %v282 = vmul.f32 %v268, %v280
        %v283 = vmul.f32 %v269, %v281
        %v284 = vld [vmem:[%s2] sm:$0x1]
        %v285 = vld [vmem:[%s3] sm:$0x1]
        %v287 = vlaneseq
        %v288 = vshrl.u32 %v287, 7
        %v289 = vsub.s32 0, %v288
        %v290 = vrot.slane %v284, %v289
        %v292 = vmul.f32 %v282, %v290
        %v293 = vmul.f32 %v283, %v290
        %v295 = vlaneseq
        %v296 = vshrl.u32 %v295, 7
        %v297 = vsub.s32 0, %v296
        %v298 = vrot.slane %v285, %v297
        %v300 = vadd.f32 %v292, %v298
        %v301 = vadd.f32 %v293, %v298
        %v302 = vld [vmem:[#allocation5] sm:$0xff]
        %v303 = vld [vmem:[#allocation5 + $0x8] sm:$0xff]
        %v304 = vadd.f32 %v300, %v302
        %v305 = vadd.f32 %v301, %v303
        %306 = vst [vmem:[%s256] sm:$0xff] %v304
        %307 = vst [vmem:[%s256 + $0x8] sm:$0xff] %v305
        %s308 = sand.u32 %s140, 1
        %s309 = scalar_lea.sflag [#allocation4], %s308
        %s310 = sand.u32 %s140, 1
        %s311 = smul.addr %s310, 16
        %s312 = scalar_lea.vmem [#allocation7], %s311
        // Predicated region
        $region45: #{tpu_custom_call.1} parent=35 // pred_check
          %p313 = pneg %p150
        $region46: #{tpu_custom_call.1} parent=35 // pred_check_branch
          %315 = sbr.rel (%p313) target = $region48
        $region47: #{tpu_custom_call.1} parent=35 // pred_region
          %s316 = smul.u32 2, %s26
          %s318 = ssub.s32 256, 256
          %319 = vsyncadd %s309, %s318
          %s320 = smul.addr %s27, 2
          %s321 = sadd.s32 %s316, %s320
          %s322 = smul.addr %s321, 128
          %s323 = scalar_lea.hbm %s4, %s322
          %s324 = sshll.u32 %s312, 4
          %s325 = int_to_ptr.vmem [resolvable:$true] %s324
          %330 = dma.vmem_to_hbm [thread:$0]  %s325, 256, %s323, %s309, 128, 128, 8
        $region48: #{tpu_custom_call.1} parent=35 // pred_fallthru
          _
      $region36: #{tpu_custom_call.1} parent=5 // pred_fallthru
        _
      %p331 = scmp.le.s32.totalorder 2, %s17
      // Predicated region
      $region49: #{tpu_custom_call.1} parent=5 // pred_check
        %p332 = pneg %p331
      $region50: #{tpu_custom_call.1} parent=5 // pred_check_branch
        %334 = sbr.rel (%p332) target = $region52
      $region51: #{tpu_custom_call.1} parent=5 // pred_region
        %s335 = ssub.s32 %s17, 2
        // Predicated region
        $region53: #{tpu_custom_call.1} parent=51 // pred_check
          %p336 = pneg %p156
        $region54: #{tpu_custom_call.1} parent=51 // pred_check_branch
          %338 = sbr.rel (%p336) target = $region56
        $region55: #{tpu_custom_call.1} parent=51 // pred_region
          %s339 = sand.u32 %s141, 1
          %s340 = scalar_lea.sflag [#allocation4], %s339
          %s341 = sand.u32 %s141, 1
          %s342 = smul.addr %s341, 16
          %s343 = scalar_lea.vmem [#allocation7], %s342
          %344 = dma.done %s340, 256
        $region56: #{tpu_custom_call.1} parent=51 // pred_fallthru
          _
      $region52: #{tpu_custom_call.1} parent=5 // pred_fallthru
        _
    $region6: #{tpu_custom_call.1} parent=1 // loop_footer
      %s21 = sadd.s32 1, %s17
    $region7: #{tpu_custom_call.1} parent=1 // loop_footer_branch
      %16 = sbr.rel target = $region3
    $region8: #{tpu_custom_call.1} parent=1 // loop_exit
      _
    %345 = vsyncpa [#allocation3], 1
    %s346 = scalar_lea.sflag [#allocation3], 1
    %347 = vsyncpa %s346, 1
    %348 = vsyncpa [#allocation6], 1
    %349 = vsyncpa [#allocation4], 1
    %s350 = scalar_lea.sflag [#allocation4], 1
    %351 = vsyncpa %s350, 1

</llo_original>
